<compile_context>
chip_gen: v5e
topology: v5e:2x2
jax: 0.10.0
libtpu: 0.0.40
codegen_flags: <defaults>
</compile_context>

<pallas_src>
import functools

import jax
import jax.numpy as jnp
from jax import lax
from jax.experimental import pallas as pl
from jax.experimental.pallas import tpu as pltpu


def _round_up(x, m):
    return ((x + m - 1) // m) * m


def _dual_loss_kernel(alpha, inv_s, n_rows, tile_rows, ragged,
                      val_ref, rec_ref, sc_ref, out_ref):
    """One B-tile of the dual-learning loss reduction.

    val_ref / rec_ref / sc_ref: (tile_rows, S) blocks of the (B, S) inputs.
    out_ref: (2,) f32 SMEM — [sp_loss, qg_loss]; doubles as the running accumulator.
    """
    i = pl.program_id(0)
    one_minus_alpha = 1.0 - alpha

    @pl.when(i == 0)
    def _init():
        out_ref[0] = jnp.float32(0.0)
        out_ref[1] = jnp.float32(0.0)

    # Single f32 upcast per channel per tile (lets upstream feed bf16 directly).
    val = val_ref[...].astype(jnp.float32)   # (tile_rows, S)
    rec = rec_ref[...].astype(jnp.float32)
    sc = rec_ref[...].astype(jnp.float32) * 0.0 + sc_ref[...].astype(jnp.float32) if False else sc_ref[...].astype(jnp.float32)

    if ragged:
        # The last tile overruns B; out-of-bounds rows contain garbage -> zero them.
        # Zeroed rows contribute exactly 0 to every sum (divisor stays the true S).
        rows = i * tile_rows + lax.broadcasted_iota(jnp.int32, val.shape, 0)
        m = rows < n_rows
        val = jnp.where(m, val, 0.0)
        rec = jnp.where(m, rec, 0.0)
        sc = jnp.where(m, sc, 0.0)

    w = alpha * val + one_minus_alpha * rec                 # (tile_rows, S)

    # Per-example sums over the sample axis S (keepdims keeps vreg-friendly 2-D shapes).
    rs_ws = jnp.sum(w * sc, axis=1, keepdims=True)          # (tile_rows, 1)
    rs_w = jnp.sum(w, axis=1, keepdims=True)
    rs_sc = jnp.sum(sc, axis=1, keepdims=True)

    # sp partial:  sum_b[ rowsum(w*sc) - (1/S)*rowsum(w)*rowsum(sc) ]
    sp_part = jnp.sum(rs_ws - inv_s * rs_w * rs_sc)
    # qg partial:  full sum of the UN-centered rec_reward
    qg_part = jnp.sum(rec)

    out_ref[0] += sp_part
    out_ref[1] += qg_part

    @pl.when(i == pl.num_programs(0) - 1)
    def _finalize():
        out_ref[0] = -inv_s * out_ref[0]
        out_ref[1] = (-one_minus_alpha * inv_s) * out_ref[1]


def _losses_xla(val, rec, sc, alpha):
    """Plain-jnp loss (mirrors the PyTorch math, reduction='sum').

    Used both as the small-batch fast path (XLA fuses it) and as the reference."""
    valf = val.astype(jnp.float32)
    recf = rec.astype(jnp.float32)
    scf = sc.astype(jnp.float32)
    val_c = valf - jnp.mean(valf, axis=-1, keepdims=True)
    rec_c = recf - jnp.mean(recf, axis=-1, keepdims=True)
    total = alpha * val_c + (1.0 - alpha) * rec_c
    sp_loss = jnp.sum(-jnp.mean(total * scf, axis=1))
    qg_loss = jnp.sum(-jnp.mean((1.0 - alpha) * recf, axis=1))
    return sp_loss, qg_loss


_SMALL_FASTPATH_ELEMS = 65536   # below this, pallas_call launch cost dominates


def dual_learning_losses(sp_val_reward, rec_reward, sp_scores, alpha=0.5,
                         reduction='sum', tile_b=4096, force_pallas=False):
    """(sp_loss, qg_loss) for cycle_start_from_sp.

    Inputs are the three (B, sample) reward / beam-log-score arrays.
    cycle_start_from_qg is the same math with `beta` in place of `alpha` and the two
    returned losses swapped.
    """
    B, S = sp_val_reward.shape

    # --- small-batch fast path: module defaults (B=6, S=5) are <1 KB of data ---------
    if not force_pallas and (3 * B * S) < _SMALL_FASTPATH_ELEMS:
        sp_loss, qg_loss = _losses_xla(sp_val_reward, rec_reward, sp_scores, alpha)
    else:
        # Row-tile multiple keeps the block sublane-aligned for the narrowest dtype.
        itemsize = max(jnp.dtype(a.dtype).itemsize
                       for a in (sp_val_reward, rec_reward, sp_scores))
        row_mult = {4: 8, 2: 16, 1: 32}.get(itemsize, 8)

        tile_rows = max(row_mult, _round_up(min(int(tile_b), 8192), row_mult))
        tile_rows = min(tile_rows, _round_up(B, row_mult))
        grid = (pl.cdiv(B, tile_rows),)
        ragged = (B % tile_rows) != 0

        # Lane-padded VMEM footprint of the double-buffered input blocks; keep the
        # compiler's scoped-VMEM limit comfortably above it (v5e default is 16 MiB,
        # v7x physical is 64 MiB -> cap at 48 MiB).
        block_bytes = tile_rows * 128 * 4
        vmem_limit = int(min(max(3 * 2 * block_bytes + 8 * 2**20, 16 * 2**20),
                             48 * 2**20))

        kernel = functools.partial(_dual_loss_kernel, float(alpha), 1.0 / float(S),
                                   B, tile_rows, ragged)
        out = pl.pallas_call(
            kernel,
            out_shape=jax.ShapeDtypeStruct((2,), jnp.float32),
            grid=grid,
            in_specs=[pl.BlockSpec((tile_rows, S), lambda i: (i, 0))] * 3,
            out_specs=pl.BlockSpec(memory_space=pltpu.SMEM),
            compiler_params=pltpu.CompilerParams(
                dimension_semantics=("arbitrary",),   # scalar accumulation across tiles
                vmem_limit_bytes=vmem_limit),
        )(sp_val_reward, rec_reward, sp_scores)
        sp_loss, qg_loss = out[0], out[1]

    if reduction == 'mean':
        # torch.mean over the per-example loss vector == summed loss / B.
        sp_loss = sp_loss / B
        qg_loss = qg_loss / B
    return sp_loss, qg_loss


if __name__ == "__main__":
    # TODO(synk): sp_model.decode_batch / qg_model / reward_model and the
    # domain.reverse / sp2qg / qg2sp vocab round-trips are external discrete-decoding
    # modules with no Pallas equivalent; their outputs (rewards, beam log-scores) are
    # synthesized here as deterministic random tensors.
    # TODO(synk): forward-only — no jax.custom_vjp is defined for the pallas_call (the
    # policy-gradient backward w.r.t. sp_scores would need one for training).
    key = jax.random.PRNGKey(0)
    k1, k2, k3 = jax.random.split(key, 3)

    def make_inputs(k, B, S, dtype=jnp.float32):
        ka, kb, kc = jax.random.split(k, 3)
        val = jax.random.uniform(ka, (B, S), dtype=jnp.float32)          # 'sp_val' reward
        rec = jax.random.uniform(kb, (B, S), dtype=jnp.float32) - 0.5    # 'sp_rec' reward
        sc = -jax.random.uniform(kc, (B, S), dtype=jnp.float32)          # beam log-probs
        return val.astype(dtype), rec.astype(dtype), sc.astype(dtype)

    ok = True

    # Case 1: module-default sizes (batch=6, sample=5).
    #   1a: default call -> small-batch XLA fast path.
    #   1b: forced through the Pallas kernel (single ragged tile, in-kernel mask).
    v, r, s = make_inputs(k1, 6, 5)
    ref_sp, ref_qg = _losses_xla(v, r, s, 0.5)
    for force in (False, True):
        sp, qg = dual_learning_losses(v, r, s, alpha=0.5, force_pallas=force)
        sp = jax.block_until_ready(sp)
        qg = jax.block_until_ready(qg)
        ok &= bool(jnp.allclose(sp, ref_sp, rtol=1e-4, atol=1e-4))
        ok &= bool(jnp.allclose(qg, ref_qg, rtol=1e-4, atol=1e-4))

    # Case 2: larger, non-tile-multiple batch -> multi-tile grid + accumulation + mask.
    v, r, s = make_inputs(k2, 333, 5)
    sp, qg = dual_learning_losses(v, r, s, alpha=0.3, tile_b=128, force_pallas=True)
    sp = jax.block_until_ready(sp)
    qg = jax.block_until_ready(qg)
    ref_sp, ref_qg = _losses_xla(v, r, s, 0.3)
    ok &= bool(jnp.allclose(sp, ref_sp, rtol=1e-4, atol=1e-4))
    ok &= bool(jnp.allclose(qg, ref_qg, rtol=1e-4, atol=1e-4))

    # Case 3: bf16 rewards/scores fed straight to the kernel (in-kernel f32 upcast).
    v, r, s = make_inputs(k3, 128, 5, dtype=jnp.bfloat16)
    sp, qg = dual_learning_losses(v, r, s, alpha=0.4, force_pallas=True)
    sp = jax.block_until_ready(sp)
    qg = jax.block_until_ready(qg)
    ref_sp, ref_qg = _losses_xla(v, r, s, 0.4)
    ok &= bool(jnp.allclose(sp, ref_sp, rtol=2e-2, atol=2e-2))
    ok &= bool(jnp.allclose(qg, ref_qg, rtol=2e-2, atol=2e-2))

    assert ok, "Pallas kernel does not match reference losses"
    print("KERNEL_OK")
</pallas_src>

<mosaic_0001>
module attributes {stable_mosaic.version = 11 : i64} {
  func.func @_dual_loss_kernel(%arg0: i32, %arg1: memref<8x5xf32, #tpu.memory_space<vmem>>, %arg2: memref<8x5xf32, #tpu.memory_space<vmem>>, %arg3: memref<8x5xf32, #tpu.memory_space<vmem>>, %arg4: memref<2xf32, #tpu.memory_space<smem>>) attributes {dimension_semantics = [#tpu.dimension_semantics<arbitrary>], iteration_bounds = array<i64: 1>, scalar_prefetch = 0 : i64, scratch_operands = 0 : i64, tpu.core_type = #tpu.core_type<tc>, window_params = [{transform_indices = @transform_0, window_bounds = array<i64: 8, 5>}, {transform_indices = @transform_1, window_bounds = array<i64: 8, 5>}, {transform_indices = @transform_2, window_bounds = array<i64: 8, 5>}, {transform_indices = @transform_3, window_bounds = array<i64: 2>}]} {
    %c0_i32 = arith.constant 0 : i32
    %0 = arith.cmpi eq, %arg0, %c0_i32 : i32
    %1 = arith.extui %0 : i1 to i32
    %c0_i32_0 = arith.constant 0 : i32
    %2 = arith.cmpi ne, %1, %c0_i32_0 : i32
    scf.if %2 {
      %cst_21 = arith.constant 0.000000e+00 : f32
      %c0_22 = arith.constant 0 : index
      %51 = memref.load %arg4[%c0_22] : memref<2xf32, #tpu.memory_space<smem>>
      memref.store %cst_21, %arg4[%c0_22] : memref<2xf32, #tpu.memory_space<smem>>
      %cst_23 = arith.constant 0.000000e+00 : f32
      %c1_24 = arith.constant 1 : index
      %52 = memref.load %arg4[%c1_24] : memref<2xf32, #tpu.memory_space<smem>>
      memref.store %cst_23, %arg4[%c1_24] : memref<2xf32, #tpu.memory_space<smem>>
    } else {
    }
    %c0 = arith.constant 0 : index
    %c0_1 = arith.constant 0 : index
    %3 = vector.load %arg1[%c0, %c0_1] : memref<8x5xf32, #tpu.memory_space<vmem>>, vector<8x5xf32>
    %c0_2 = arith.constant 0 : index
    %c0_3 = arith.constant 0 : index
    %4 = vector.load %arg2[%c0_2, %c0_3] : memref<8x5xf32, #tpu.memory_space<vmem>>, vector<8x5xf32>
    %c0_4 = arith.constant 0 : index
    %c0_5 = arith.constant 0 : index
    %5 = vector.load %arg3[%c0_4, %c0_5] : memref<8x5xf32, #tpu.memory_space<vmem>>, vector<8x5xf32>
    %c8_i32 = arith.constant 8 : i32
    %6 = arith.muli %arg0, %c8_i32 : i32
    %7 = tpu.iota {dimensions = array<i32: 0>} : vector<8x5xi32>
    %8 = vector.broadcast %6 : i32 to vector<8x5xi32>
    %9 = arith.addi %8, %7 : vector<8x5xi32>
    %c6_i32 = arith.constant 6 : i32
    %10 = vector.broadcast %c6_i32 : i32 to vector<8x5xi32>
    %11 = arith.cmpi slt, %9, %10 : vector<8x5xi32>
    %cst = arith.constant 0.000000e+00 : f32
    %12 = vector.broadcast %cst : f32 to vector<8x5xf32>
    %13 = arith.select %11, %3, %12 : vector<8x5xi1>, vector<8x5xf32>
    %cst_6 = arith.constant 0.000000e+00 : f32
    %14 = vector.broadcast %cst_6 : f32 to vector<8x5xf32>
    %15 = arith.select %11, %4, %14 : vector<8x5xi1>, vector<8x5xf32>
    %cst_7 = arith.constant 0.000000e+00 : f32
    %16 = vector.broadcast %cst_7 : f32 to vector<8x5xf32>
    %17 = arith.select %11, %5, %16 : vector<8x5xi1>, vector<8x5xf32>
    %cst_8 = arith.constant 5.000000e-01 : f32
    %18 = vector.broadcast %cst_8 : f32 to vector<8x5xf32>
    %19 = arith.mulf %18, %13 : vector<8x5xf32>
    %cst_9 = arith.constant 5.000000e-01 : f32
    %20 = vector.broadcast %cst_9 : f32 to vector<8x5xf32>
    %21 = arith.mulf %20, %15 : vector<8x5xf32>
    %22 = arith.addf %19, %21 : vector<8x5xf32>
    %23 = arith.mulf %22, %17 : vector<8x5xf32>
    %cst_10 = arith.constant dense<0.000000e+00> : vector<8xf32>
    %24 = vector.multi_reduction <add>, %23, %cst_10 [1] : vector<8x5xf32> to vector<8xf32>
    %25 = vector.shape_cast %24 : vector<8xf32> to vector<8x1xf32>
    %cst_11 = arith.constant dense<0.000000e+00> : vector<8xf32>
    %26 = vector.multi_reduction <add>, %22, %cst_11 [1] : vector<8x5xf32> to vector<8xf32>
    %27 = vector.shape_cast %26 : vector<8xf32> to vector<8x1xf32>
    %cst_12 = arith.constant dense<0.000000e+00> : vector<8xf32>
    %28 = vector.multi_reduction <add>, %17, %cst_12 [1] : vector<8x5xf32> to vector<8xf32>
    %29 = vector.shape_cast %28 : vector<8xf32> to vector<8x1xf32>
    %cst_13 = arith.constant 2.000000e-01 : f32
    %30 = vector.broadcast %cst_13 : f32 to vector<8x1xf32>
    %31 = arith.mulf %30, %27 : vector<8x1xf32>
    %32 = arith.mulf %31, %29 : vector<8x1xf32>
    %33 = arith.subf %25, %32 : vector<8x1xf32>
    %34 = vector.shape_cast %33 : vector<8x1xf32> to vector<1x8x1xf32>
    %cst_14 = arith.constant dense<0.000000e+00> : vector<1xf32>
    %35 = vector.multi_reduction <add>, %34, %cst_14 [1, 2] : vector<1x8x1xf32> to vector<1xf32>
    %36 = vector.shape_cast %35 : vector<1xf32> to vector<1x1x1xf32>
    %37 = vector.extract %36[0, 0, 0] : f32 from vector<1x1x1xf32>
    %38 = vector.shape_cast %15 : vector<8x5xf32> to vector<1x8x5xf32>
    %cst_15 = arith.constant dense<0.000000e+00> : vector<1xf32>
    %39 = vector.multi_reduction <add>, %38, %cst_15 [1, 2] : vector<1x8x5xf32> to vector<1xf32>
    %40 = vector.shape_cast %39 : vector<1xf32> to vector<1x1x1xf32>
    %41 = vector.extract %40[0, 0, 0] : f32 from vector<1x1x1xf32>
    %c0_16 = arith.constant 0 : index
    %42 = memref.load %arg4[%c0_16] : memref<2xf32, #tpu.memory_space<smem>>
    %43 = arith.addf %42, %37 : f32
    %c0_17 = arith.constant 0 : index
    %44 = memref.load %arg4[%c0_17] : memref<2xf32, #tpu.memory_space<smem>>
    memref.store %43, %arg4[%c0_17] : memref<2xf32, #tpu.memory_space<smem>>
    %c1 = arith.constant 1 : index
    %45 = memref.load %arg4[%c1] : memref<2xf32, #tpu.memory_space<smem>>
    %46 = arith.addf %45, %41 : f32
    %c1_18 = arith.constant 1 : index
    %47 = memref.load %arg4[%c1_18] : memref<2xf32, #tpu.memory_space<smem>>
    memref.store %46, %arg4[%c1_18] : memref<2xf32, #tpu.memory_space<smem>>
    %c0_i32_19 = arith.constant 0 : i32
    %48 = arith.cmpi eq, %arg0, %c0_i32_19 : i32
    %49 = arith.extui %48 : i1 to i32
    %c0_i32_20 = arith.constant 0 : i32
    %50 = arith.cmpi ne, %49, %c0_i32_20 : i32
    scf.if %50 {
      %c0_21 = arith.constant 0 : index
      %51 = memref.load %arg4[%c0_21] : memref<2xf32, #tpu.memory_space<smem>>
      %cst_22 = arith.constant -2.000000e-01 : f32
      %52 = arith.mulf %cst_22, %51 : f32
      %c0_23 = arith.constant 0 : index
      %53 = memref.load %arg4[%c0_23] : memref<2xf32, #tpu.memory_space<smem>>
      memref.store %52, %arg4[%c0_23] : memref<2xf32, #tpu.memory_space<smem>>
      %c1_24 = arith.constant 1 : index
      %54 = memref.load %arg4[%c1_24] : memref<2xf32, #tpu.memory_space<smem>>
      %cst_25 = arith.constant -1.000000e-01 : f32
      %55 = arith.mulf %cst_25, %54 : f32
      %c1_26 = arith.constant 1 : index
      %56 = memref.load %arg4[%c1_26] : memref<2xf32, #tpu.memory_space<smem>>
      memref.store %55, %arg4[%c1_26] : memref<2xf32, #tpu.memory_space<smem>>
    } else {
    }
    return
  }
  func.func @transform_0(%arg0: i32) -> (i32, i32) {
    %c0_i32 = arith.constant 0 : i32
    %c0_i32_0 = arith.constant 0 : i32
    return %arg0, %c0_i32 : i32, i32
  }
  func.func @transform_1(%arg0: i32) -> (i32, i32) {
    %c0_i32 = arith.constant 0 : i32
    %c0_i32_0 = arith.constant 0 : i32
    return %arg0, %c0_i32 : i32, i32
  }
  func.func @transform_2(%arg0: i32) -> (i32, i32) {
    %c0_i32 = arith.constant 0 : i32
    %c0_i32_0 = arith.constant 0 : i32
    return %arg0, %c0_i32 : i32, i32
  }
  func.func @transform_3(%arg0: i32) -> i32 {
    %c0_i32 = arith.constant 0 : i32
    %c0_i32_0 = arith.constant 0 : i32
    return %c0_i32 : i32
  }
}

</mosaic_0001>

<llo_original>
// kernel: tpu_custom_call.1
$region0: #{tpu_custom_call.1}
  #allocation0 [shape = 'u32[]', space=smem, size = 0x4, offset = 0x4, fixed_abs, tag = 'smem constant byte address 0x4 - core index']
  #allocation1 [shape = 'u32[72,128]{1,0:T(1,128)}', space=vmem, size = 0x9000, scoped, tag = 'internal scratch']
  %s0 = inlined_call_operand.hbm [shape: f32[6,5], index: 0, kind: input, shape index: {}]
  %s1 = inlined_call_operand.hbm [shape: f32[6,5], index: 1, kind: input, shape index: {}]
  %s2 = inlined_call_operand.hbm [shape: f32[6,5], index: 2, kind: input, shape index: {}]
  %s3 = inlined_call_operand.hbm [shape: f32[2], index: 3, kind: output, shape index: {}]
  %s4 = sld [smem:[#allocation0]]
  $region42: #{tpu_custom_call.1} parent=0
    _
  %s6 = ssub.s32 1, %s4
  %s7 = scalar_select 0, %s6, %s4
  $region1: #{tpu_custom_call.1} parent=0
    #allocation2 [shape = 'u8[4096]{0}', space=vmem, size = 0x1000, scoped, tag = 'input window, operand 0, single buffered']
    #allocation3 [shape = 's32[1]{0}', space=sflag, size = 0x4, scoped, tag = 'scoped memory for tpu_custom_call.1']
    #allocation4 [shape = 's32[1]{0}', space=sflag, size = 0x4, scoped, tag = 'scoped memory for tpu_custom_call.1']
    #allocation5 [shape = 'u8[4096]{0}', space=vmem, size = 0x1000, scoped, tag = 'input window, operand 1, single buffered']
    #allocation6 [shape = 's32[1]{0}', space=sflag, size = 0x4, scoped, tag = 'scoped memory for tpu_custom_call.1']
    #allocation7 [shape = 'u8[4096]{0}', space=vmem, size = 0x1000, scoped, tag = 'input window, operand 2, single buffered']
    #allocation8 [shape = 'u8[512]{0}', space=smem, size = 0x200, scoped, tag = 'output window, operand 0, single buffered']
    %8 = vsyncpa [#allocation3], 0
    %9 = vsyncpa [#allocation6], 0
    %10 = vsyncpa [#allocation4], 0
    // Predicated region
    $region2: #{tpu_custom_call.1} parent=1 // pred_check
      _
    $region3: #{tpu_custom_call.1} parent=1 // pred_check_branch
      %12 = sbr.rel (0) target = $region5
    $region4: #{tpu_custom_call.1} parent=1 // pred_region
      %14 = vsyncadd [#allocation3], 0
      %s16 = sshll.u32 %s0, 4
      %s17 = int_to_ptr.hbm [resolvable:$true] %s16
      %s18 = sshll.u32 [#allocation2], 4
      %s19 = int_to_ptr.vmem [resolvable:$true] %s18
      %21 = dma.hbm_to_vmem [thread:$0]  %s17, 128, %s19, [#allocation3]
    $region5: #{tpu_custom_call.1} parent=1 // pred_fallthru
      _
    // Predicated region
    $region6: #{tpu_custom_call.1} parent=1 // pred_check
      _
    $region7: #{tpu_custom_call.1} parent=1 // pred_check_branch
      %23 = sbr.rel (0) target = $region9
    $region8: #{tpu_custom_call.1} parent=1 // pred_region
      %25 = vsyncadd [#allocation6], 0
      %s27 = sshll.u32 %s1, 4
      %s28 = int_to_ptr.hbm [resolvable:$true] %s27
      %s29 = sshll.u32 [#allocation5], 4
      %s30 = int_to_ptr.vmem [resolvable:$true] %s29
      %32 = dma.hbm_to_vmem [thread:$0]  %s28, 128, %s30, [#allocation6]
    $region9: #{tpu_custom_call.1} parent=1 // pred_fallthru
      _
    // Predicated region
    $region10: #{tpu_custom_call.1} parent=1 // pred_check
      _
    $region11: #{tpu_custom_call.1} parent=1 // pred_check_branch
      %34 = sbr.rel (0) target = $region13
    $region12: #{tpu_custom_call.1} parent=1 // pred_region
      %36 = vsyncadd [#allocation6], 0
      %s38 = sshll.u32 %s2, 4
      %s39 = int_to_ptr.hbm [resolvable:$true] %s38
      %s40 = sshll.u32 [#allocation7], 4
      %s41 = int_to_ptr.vmem [resolvable:$true] %s40
      %43 = dma.hbm_to_vmem [thread:$0]  %s39, 128, %s41, [#allocation6]
    $region13: #{tpu_custom_call.1} parent=1 // pred_fallthru
      _
    // Predicated region
    $region14: #{tpu_custom_call.1} parent=1 // pred_check
      _
    $region15: #{tpu_custom_call.1} parent=1 // pred_check_branch
      %45 = sbr.rel (0) target = $region17
    $region16: #{tpu_custom_call.1} parent=1 // pred_region
      %47 = dma.done [#allocation3], 128
    $region17: #{tpu_custom_call.1} parent=1 // pred_fallthru
      _
    // Predicated region
    $region18: #{tpu_custom_call.1} parent=1 // pred_check
      _
    $region19: #{tpu_custom_call.1} parent=1 // pred_check_branch
      %49 = sbr.rel (0) target = $region21
    $region20: #{tpu_custom_call.1} parent=1 // pred_region
      %51 = dma.done [#allocation6], 128
    $region21: #{tpu_custom_call.1} parent=1 // pred_fallthru
      _
    // Predicated region
    $region22: #{tpu_custom_call.1} parent=1 // pred_check
      _
    $region23: #{tpu_custom_call.1} parent=1 // pred_check_branch
      %53 = sbr.rel (0) target = $region25
    $region24: #{tpu_custom_call.1} parent=1 // pred_region
      %55 = dma.done [#allocation6], 128
    $region25: #{tpu_custom_call.1} parent=1 // pred_fallthru
      _
    %p56 = scmp.eq.s32.totalorder 0, 0
    // Predicated region
    $region26: #{tpu_custom_call.1} parent=1 // pred_check
      %p57 = pneg %p56
    $region27: #{tpu_custom_call.1} parent=1 // pred_check_branch
      %59 = sbr.rel (%p57) target = $region29
    $region28: #{tpu_custom_call.1} parent=1 // pred_region
      %s60 = scalar_lea.smem [#allocation8], 0
      %61 = sst [smem:[%s60]] 0.0
      %s62 = scalar_lea.smem [#allocation8], 1
      %63 = sst [smem:[%s62]] 0.0
    $region29: #{tpu_custom_call.1} parent=1 // pred_fallthru
      _
    %v64 = vld [vmem:[#allocation2] sm:$0xff]
    %v65 = vld [vmem:[#allocation5] sm:$0xff]
    %v66 = vld [vmem:[#allocation7] sm:$0xff]
    %s67 = smul.u32 0, 8
    %v68 = vlaneseq
    %v69 = vshrl.u32 %v68, 7
    %v70 = vstv %s67
    %v71 = vadd.s32 %v70, %v69
    %vm72 = vcmp.lt.s32.totalorder %v71, 6
    %v73 = vsel %vm72, %v64, 0.0
    %v74 = vsel %vm72, %v65, 0.0
    %v75 = vsel %vm72, %v66, 0.0
    %v76 = vmul.f32 %v73, 0.5
    %v77 = vmul.f32 %v74, 0.5
    %v78 = vadd.f32 %v76, %v77
    %v79 = vmul.f32 %v78, %v75
    %vm80 = vcmask 39936
    %v81 = vsel %vm80, %v79, 0.0
    %82 = vadd.xlane.f32.xlu0 %v81
    %v83 = vpop.xlane.xlu0 %82
    %v84 = vsel %vm80, %v78, 0.0
    %85 = vadd.xlane.f32.xlu0 %v84
    %v86 = vpop.xlane.xlu0 %85
    %v87 = vsel %vm80, %v75, 0.0
    %88 = vadd.xlane.f32.xlu0 %v87
    %v89 = vpop.xlane.xlu0 %88
    %v90 = vmul.f32 %v86, 0.2
    %v91 = vmul.f32 %v90, %v89
    %v92 = vsub.f32 %v83, %v91
    %vm93 = vcmask 7168
    %v94 = vsel %vm93, %v92, 0.0
    %95 = vadd.xlane.f32.xlu0 %v94
    %v96 = vpop.xlane.xlu0 %95
    %v97 = vrot.slane %v96, 4
    %v98 = vadd.f32 %v96, %v97
    %v99 = vrot.slane %v98, 2
    %v100 = vadd.f32 %v98, %v99
    %v101 = vrot.slane %v100, 1
    %v102 = vadd.f32 %v100, %v101
    %s103 = vtos %v102
    %v104 = vsel %vm80, %v74, 0.0
    %105 = vadd.xlane.f32.xlu0 %v104
    %v106 = vpop.xlane.xlu0 %105
    %v107 = vrot.slane %v106, 4
    %v108 = vadd.f32 %v106, %v107
    %v109 = vrot.slane %v108, 2
    %v110 = vadd.f32 %v108, %v109
    %v111 = vrot.slane %v110, 1
    %v112 = vadd.f32 %v110, %v111
    %s113 = vtos %v112
    %s114 = sld [smem:[#allocation8]]
    %s115 = sadd.f32 %s114, %s103
    %s116 = scalar_lea.smem [#allocation8], 0
    %117 = sst [smem:[%s116]] %s115
    %s118 = sld [smem:[#allocation8 + $0x1]]
    %s119 = sadd.f32 %s118, %s113
    %s120 = scalar_lea.smem [#allocation8], 1
    %121 = sst [smem:[%s120]] %s119
    // Predicated region
    $region30: #{tpu_custom_call.1} parent=1 // pred_check
      %p122 = pneg %p56
    $region31: #{tpu_custom_call.1} parent=1 // pred_check_branch
      %124 = sbr.rel (%p122) target = $region33
    $region32: #{tpu_custom_call.1} parent=1 // pred_region
      %s125 = sld [smem:[#allocation8]]
      %s126 = smul.f32 %s125, -0.2
      %127 = sst [smem:[%s116]] %s126
      %s128 = sld [smem:[#allocation8 + $0x1]]
      %s129 = smul.f32 %s128, -0.1
      %130 = sst [smem:[%s120]] %s129
    $region33: #{tpu_custom_call.1} parent=1 // pred_fallthru
      _
    // Predicated region
    $region34: #{tpu_custom_call.1} parent=1 // pred_check
      _
    $region35: #{tpu_custom_call.1} parent=1 // pred_check_branch
      %132 = sbr.rel (0) target = $region37
    $region36: #{tpu_custom_call.1} parent=1 // pred_region
      %134 = vsyncadd [#allocation4], 0
      %s136 = sshll.u32 %s3, 4
      %s137 = int_to_ptr.hbm [resolvable:$true] %s136
      %139 = dma.smem_to_hbm [#allocation8], 16, %s137, [#allocation4]
    $region37: #{tpu_custom_call.1} parent=1 // pred_fallthru
      _
    // Predicated region
    $region38: #{tpu_custom_call.1} parent=1 // pred_check
      _
    $region39: #{tpu_custom_call.1} parent=1 // pred_check_branch
      %141 = sbr.rel (0) target = $region41
    $region40: #{tpu_custom_call.1} parent=1 // pred_region
      %143 = dma.done [#allocation4], 16
    $region41: #{tpu_custom_call.1} parent=1 // pred_fallthru
      _
    %144 = sfence
    %145 = vsyncpa [#allocation3], 1
    %146 = vsyncpa [#allocation6], 1
    %147 = vsyncpa [#allocation4], 1

</llo_original>
